<compile_context>
chip_gen: v5e
topology: v5e:2x2
jax: 0.10.0
libtpu: 0.0.40
codegen_flags: <defaults>
</compile_context>

<pallas_src>
import functools

import jax
import jax.numpy as jnp
from jax.experimental import pallas as pl
from jax.experimental.pallas import tpu as pltpu

EPS = 1e-5


def bn_add_relu_kernel(x_ref, res_ref, gb_ref, o_ref, *, nhw):
    # x_ref, res_ref, o_ref: (N, Cb, HW) blocks; gb_ref: (Cb, 2) [gamma, beta]
    x = x_ref[...].astype(jnp.float32)

    inv_n = 1.0 / nhw  # true N*H*W element count per channel

    # One-pass per-channel batch statistics over this channel block.
    s1 = jnp.sum(x, axis=(0, 2), keepdims=True)       # (1, Cb, 1)
    s2 = jnp.sum(x * x, axis=(0, 2), keepdims=True)   # (1, Cb, 1)
    mean = s1 * inv_n
    var = jnp.maximum(s2 * inv_n - mean * mean, 0.0)   # clamp f32 cancellation
    inv_std = jax.lax.rsqrt(var + EPS)                 # EUP rsqrt

    # Fold affine into per-channel scale/shift: y = x * a + b
    gamma = gb_ref[:, 0:1].astype(jnp.float32)         # (Cb, 1)
    beta = gb_ref[:, 1:2].astype(jnp.float32)          # (Cb, 1)
    a = gamma * inv_std                                # (1, Cb, 1)
    b = beta - mean * a                                # (1, Cb, 1)

    # Residual read inline (kept out of the live set during the stats pass).
    o_ref[...] = jnp.maximum(
        x * a + b + res_ref[...].astype(jnp.float32), 0.0
    ).astype(o_ref.dtype)


def bn_add_relu(x46, x39, gamma, beta):
    """x46, x39: NCHW arrays of identical shape. gamma, beta: (C,)."""
    N, C, H, W = x46.shape
    HW = H * W
    nhw = N * HW

    # NCHW -> (N, C, H*W): pure contiguous reshape, no transpose / copy / pad.
    x3 = x46.reshape(N, C, HW)
    r3 = x39.reshape(N, C, HW)
    gb = jnp.stack([gamma, beta], axis=-1)             # (C, 2), one tiny DMA

    # Channel blocking: 2 parallel blocks (multiple of 8, >= 40 channels) when
    # C allows; otherwise a single full-C block.  BN stats are per-channel so
    # channel blocks are independent and exactly correct.
    if C % 2 == 0 and (C // 2) % 8 == 0 and (C // 2) >= 40:
        cb = C // 2
    else:
        cb = C
    n_blocks = C // cb

    out3 = pl.pallas_call(
        functools.partial(bn_add_relu_kernel, nhw=float(nhw)),
        out_shape=jax.ShapeDtypeStruct((N, C, HW), x46.dtype),
        grid=(n_blocks,),
        in_specs=[
            pl.BlockSpec((N, cb, HW), lambda c: (0, c, 0)),
            pl.BlockSpec((N, cb, HW), lambda c: (0, c, 0)),
            pl.BlockSpec((cb, 2), lambda c: (c, 0)),
        ],
        out_specs=pl.BlockSpec((N, cb, HW), lambda c: (0, c, 0)),
        compiler_params=pltpu.CompilerParams(
            dimension_semantics=("parallel",)
        ),
    )(x3, r3, gb)

    # Restore NCHW (pure reshape).
    return out3.reshape(N, C, H, W)


def _reference(x46, x39, gamma, beta):
    mean = jnp.mean(x46, axis=(0, 2, 3), keepdims=True)
    var = jnp.mean((x46 - mean) ** 2, axis=(0, 2, 3), keepdims=True)
    y = (x46 - mean) / jnp.sqrt(var + EPS)
    y = y * gamma.reshape(1, -1, 1, 1) + beta.reshape(1, -1, 1, 1)
    return jnp.maximum(y + x39, 0.0)


if __name__ == "__main__":
    key = jax.random.PRNGKey(0)
    k1, k2, k3, k4 = jax.random.split(key, 4)

    N, C, H, W = 1, 160, 14, 14  # shapes implied by BatchNorm2d(160) + inputs
    x46 = jax.random.normal(k1, (N, C, H, W), dtype=jnp.float32)
    x39 = jax.random.normal(k2, (N, C, H, W), dtype=jnp.float32)
    # deterministic affine parameters (synthetic, not a checkpoint load)
    gamma = 1.0 + 0.1 * jax.random.normal(k3, (C,), dtype=jnp.float32)
    beta = 0.1 * jax.random.normal(k4, (C,), dtype=jnp.float32)

    out = bn_add_relu(x46, x39, gamma, beta)
    out = jax.block_until_ready(out)

    ref = _reference(x46, x39, gamma, beta)
    assert out.shape == (N, C, H, W)
    assert jnp.allclose(out, ref, atol=1e-4, rtol=1e-4), float(
        jnp.max(jnp.abs(out - ref))
    )
    print("KERNEL_OK")
</pallas_src>

<mosaic_0001>
module attributes {stable_mosaic.version = 11 : i64} {
  func.func @bn_add_relu_kernel(%arg0: i32, %arg1: memref<1x80x196xf32, #tpu.memory_space<vmem>>, %arg2: memref<1x80x196xf32, #tpu.memory_space<vmem>>, %arg3: memref<80x2xf32, #tpu.memory_space<vmem>>, %arg4: memref<1x80x196xf32, #tpu.memory_space<vmem>>) attributes {dimension_semantics = [#tpu.dimension_semantics<parallel>], iteration_bounds = array<i64: 2>, scalar_prefetch = 0 : i64, scratch_operands = 0 : i64, tpu.core_type = #tpu.core_type<tc>, window_params = [{transform_indices = @transform_0, window_bounds = array<i64: 1, 80, 196>}, {transform_indices = @transform_1, window_bounds = array<i64: 1, 80, 196>}, {transform_indices = @transform_2, window_bounds = array<i64: 80, 2>}, {transform_indices = @transform_3, window_bounds = array<i64: 1, 80, 196>}]} {
    %c0 = arith.constant 0 : index
    %c0_0 = arith.constant 0 : index
    %c0_1 = arith.constant 0 : index
    %0 = vector.load %arg1[%c0, %c0_0, %c0_1] : memref<1x80x196xf32, #tpu.memory_space<vmem>>, vector<1x80x196xf32>
    %cst = arith.constant dense<0.000000e+00> : vector<80xf32>
    %1 = vector.multi_reduction <add>, %0, %cst [0, 2] : vector<1x80x196xf32> to vector<80xf32>
    %2 = vector.shape_cast %1 : vector<80xf32> to vector<1x80x1xf32>
    %3 = arith.mulf %0, %0 : vector<1x80x196xf32>
    %cst_2 = arith.constant dense<0.000000e+00> : vector<80xf32>
    %4 = vector.multi_reduction <add>, %3, %cst_2 [0, 2] : vector<1x80x196xf32> to vector<80xf32>
    %5 = vector.shape_cast %4 : vector<80xf32> to vector<1x80x1xf32>
    %cst_3 = arith.constant 0.00510204071 : f32
    %6 = vector.broadcast %cst_3 : f32 to vector<1x80x1xf32>
    %7 = arith.mulf %2, %6 : vector<1x80x1xf32>
    %cst_4 = arith.constant 0.00510204071 : f32
    %8 = vector.broadcast %cst_4 : f32 to vector<1x80x1xf32>
    %9 = arith.mulf %5, %8 : vector<1x80x1xf32>
    %10 = arith.mulf %7, %7 : vector<1x80x1xf32>
    %11 = arith.subf %9, %10 : vector<1x80x1xf32>
    %cst_5 = arith.constant 0.000000e+00 : f32
    %12 = vector.broadcast %cst_5 : f32 to vector<1x80x1xf32>
    %13 = arith.maximumf %11, %12 : vector<1x80x1xf32>
    %cst_6 = arith.constant 9.99999974E-6 : f32
    %14 = vector.broadcast %cst_6 : f32 to vector<1x80x1xf32>
    %15 = arith.addf %13, %14 : vector<1x80x1xf32>
    %16 = math.rsqrt %15 : vector<1x80x1xf32>
    %c0_7 = arith.constant 0 : index
    %c0_8 = arith.constant 0 : index
    %17 = vector.load %arg3[%c0_7, %c0_8] : memref<80x2xf32, #tpu.memory_space<vmem>>, vector<80x1xf32>
    %c0_9 = arith.constant 0 : index
    %c1 = arith.constant 1 : index
    %18 = vector.load %arg3[%c0_9, %c1] : memref<80x2xf32, #tpu.memory_space<vmem>>, vector<80x1xf32>
    %19 = vector.shape_cast %17 : vector<80x1xf32> to vector<1x80x1xf32>
    %20 = arith.mulf %19, %16 : vector<1x80x1xf32>
    %21 = arith.mulf %7, %20 : vector<1x80x1xf32>
    %22 = vector.shape_cast %18 : vector<80x1xf32> to vector<1x80x1xf32>
    %23 = arith.subf %22, %21 : vector<1x80x1xf32>
    %24 = vector.broadcast %20 : vector<1x80x1xf32> to vector<1x80x196xf32>
    %25 = arith.mulf %0, %24 : vector<1x80x196xf32>
    %26 = vector.broadcast %23 : vector<1x80x1xf32> to vector<1x80x196xf32>
    %27 = arith.addf %25, %26 : vector<1x80x196xf32>
    %c0_10 = arith.constant 0 : index
    %c0_11 = arith.constant 0 : index
    %c0_12 = arith.constant 0 : index
    %28 = vector.load %arg2[%c0_10, %c0_11, %c0_12] : memref<1x80x196xf32, #tpu.memory_space<vmem>>, vector<1x80x196xf32>
    %29 = arith.addf %27, %28 : vector<1x80x196xf32>
    %cst_13 = arith.constant 0.000000e+00 : f32
    %30 = vector.broadcast %cst_13 : f32 to vector<1x80x196xf32>
    %31 = arith.maximumf %29, %30 : vector<1x80x196xf32>
    %c0_14 = arith.constant 0 : index
    %c0_15 = arith.constant 0 : index
    %c0_16 = arith.constant 0 : index
    %32 = vector.load %arg4[%c0_14, %c0_15, %c0_16] : memref<1x80x196xf32, #tpu.memory_space<vmem>>, vector<1x80x196xf32>
    tpu.vector_store %arg4[%c0_14, %c0_15, %c0_16], %31 {strides = array<i32>} : memref<1x80x196xf32, #tpu.memory_space<vmem>>, vector<1x80x196xf32>,
    return
  }
  func.func @transform_0(%arg0: i32) -> (i32, i32, i32) {
    %c0_i32 = arith.constant 0 : i32
    %c0_i32_0 = arith.constant 0 : i32
    %c0_i32_1 = arith.constant 0 : i32
    return %c0_i32, %arg0, %c0_i32_0 : i32, i32, i32
  }
  func.func @transform_1(%arg0: i32) -> (i32, i32, i32) {
    %c0_i32 = arith.constant 0 : i32
    %c0_i32_0 = arith.constant 0 : i32
    %c0_i32_1 = arith.constant 0 : i32
    return %c0_i32, %arg0, %c0_i32_0 : i32, i32, i32
  }
  func.func @transform_2(%arg0: i32) -> (i32, i32) {
    %c0_i32 = arith.constant 0 : i32
    %c0_i32_0 = arith.constant 0 : i32
    return %arg0, %c0_i32 : i32, i32
  }
  func.func @transform_3(%arg0: i32) -> (i32, i32, i32) {
    %c0_i32 = arith.constant 0 : i32
    %c0_i32_0 = arith.constant 0 : i32
    %c0_i32_1 = arith.constant 0 : i32
    return %c0_i32, %arg0, %c0_i32_0 : i32, i32, i32
  }
}

</mosaic_0001>

<llo_original>
// kernel: tpu_custom_call.1
$region0: #{tpu_custom_call.1}
  #allocation0 [shape = 'u32[]', space=smem, size = 0x4, offset = 0x4, fixed_abs, tag = 'smem constant byte address 0x4 - core index']
  #allocation1 [shape = 'u32[72,128]{1,0:T(1,128)}', space=vmem, size = 0x9000, scoped, tag = 'internal scratch']
  %s0 = inlined_call_operand.hbm [shape: f32[1,160,196], index: 0, kind: input, shape index: {}]
  %s1 = inlined_call_operand.hbm [shape: f32[1,160,196], index: 1, kind: input, shape index: {}]
  %s2 = inlined_call_operand.vmem [shape: f32[160,2], index: 2, kind: input, shape index: {}]
  %s3 = inlined_call_operand.hbm [shape: f32[1,160,196], index: 3, kind: output, shape index: {}]
  %s4 = sld [smem:[#allocation0]]
  $region53: #{tpu_custom_call.1} parent=0
    _
  %s6 = ssub.s32 1, %s4
  %s7 = scalar_select 0, %s6, %s4
  $region1: #{tpu_custom_call.1} parent=0
    #allocation2 [shape = 'u8[163840]{0}', space=vmem, size = 0x28000, scoped, tag = 'input window, operand 0']
    #allocation3 [shape = 's32[2]{0}', space=sflag, size = 0x8, scoped, tag = 'scoped memory for tpu_custom_call.1']
    #allocation4 [shape = 's32[2]{0}', space=sflag, size = 0x8, scoped, tag = 'scoped memory for tpu_custom_call.1']
    #allocation5 [shape = 'u8[163840]{0}', space=vmem, size = 0x28000, scoped, tag = 'input window, operand 1']
    #allocation6 [shape = 's32[2]{0}', space=sflag, size = 0x8, scoped, tag = 'scoped memory for tpu_custom_call.1']
    #allocation7 [shape = 'u8[163840]{0}', space=vmem, size = 0x28000, scoped, tag = 'output window, operand 0']
    %8 = vsyncpa [#allocation3], 0
    %s9 = scalar_lea.sflag [#allocation3], 1
    %10 = vsyncpa %s9, 0
    %11 = vsyncpa [#allocation6], 0
    %s12 = scalar_lea.sflag [#allocation6], 1
    %13 = vsyncpa %s12, 0
    %14 = vsyncpa [#allocation4], 0
    %s15 = scalar_lea.sflag [#allocation4], 1
    %16 = vsyncpa %s15, 0
    loop: start=0, step=1, limit=4
    $region2: #{tpu_custom_call.1} parent=1 // loop_pre_header
      _
    $region3: #{tpu_custom_call.1} parent=1 // loop_header
      %s18 = sphi 0, %s22
      %p19 = scmp.ge.s32.totalorder %s18, 4
      %s28 = sphi 0, %s30
      %s31 = sphi 0, %s28
      %s32 = sphi 0, %s31
      %s48 = sphi 0, %s32
      %s54 = sphi 0, %s56
      %s57 = sphi 0, %s54
      %s58 = sphi 0, %s57
      %s74 = sphi 0, %s58
      %s80 = sphi 0, %s82
      %s83 = sphi 0, %s80
      %s84 = sphi 0, %s83
      %s100 = sphi 0, %s84
      %s106 = sphi 0, %s108
      %s109 = sphi 0, %s106
      %s110 = sphi 0, %s109
      %s126 = sphi 0, %s110
    $region4: #{tpu_custom_call.1} parent=1 // loop_header_branch
      %21 = sbr.rel (%p19) target = $region8
    $region5: #{tpu_custom_call.1} parent=1 // loop_body
      %s23 = ssub.s32 %s18, 1
      %s24 = ssub.s32 %s18, 2
      %s25 = sadd.s32 %s18, 1
      %s26 = ssub.s32 %s18, %s25
      %p27 = scmp.eq.s32.totalorder %s26, 0
      %s29 = sadd.s32 %s28, 1
      %s30 = scalar_select %p27, %s28, %s29
      %p33 = pneg %p27
      %p34 = scmp.eq.s32.totalorder %s18, 1
      %p35 = por %p33, %p34
      %p36 = scmp.ne.s32.totalorder %s28, %s31
      %p37 = scmp.eq.s32.totalorder %s18, 0
      %p38 = por %p36, %p37
      %p39 = scmp.ne.s32.totalorder %s28, %s31
      %p40 = scmp.eq.s32.totalorder %s23, 1
      %p41 = por %p39, %p40
      %p42 = scmp.ne.s32.totalorder %s31, %s32
      %p43 = scmp.eq.s32.totalorder %s23, 0
      %p44 = por %p42, %p43
      %p45 = scmp.ne.s32.totalorder %s31, %s32
      %p46 = scmp.eq.s32.totalorder %s24, 1
      %p47 = por %p45, %p46
      %p49 = scmp.ne.s32.totalorder %s32, %s48
      %p50 = scmp.eq.s32.totalorder %s24, 0
      %p51 = por %p49, %p50
      %s52 = ssub.s32 %s18, %s25
      %p53 = scmp.eq.s32.totalorder %s52, 0
      %s55 = sadd.s32 %s54, 1
      %s56 = scalar_select %p53, %s54, %s55
      %p59 = pneg %p53
      %p60 = scmp.eq.s32.totalorder %s18, 1
      %p61 = por %p59, %p60
      %p62 = scmp.ne.s32.totalorder %s54, %s57
      %p63 = scmp.eq.s32.totalorder %s18, 0
      %p64 = por %p62, %p63
      %p65 = scmp.ne.s32.totalorder %s54, %s57
      %p66 = scmp.eq.s32.totalorder %s23, 1
      %p67 = por %p65, %p66
      %p68 = scmp.ne.s32.totalorder %s57, %s58
      %p69 = scmp.eq.s32.totalorder %s23, 0
      %p70 = por %p68, %p69
      %p71 = scmp.ne.s32.totalorder %s57, %s58
      %p72 = scmp.eq.s32.totalorder %s24, 1
      %p73 = por %p71, %p72
      %p75 = scmp.ne.s32.totalorder %s58, %s74
      %p76 = scmp.eq.s32.totalorder %s24, 0
      %p77 = por %p75, %p76
      %s78 = ssub.s32 %s18, %s25
      %p79 = scmp.eq.s32.totalorder %s78, 0
      %s81 = sadd.s32 %s80, 1
      %s82 = scalar_select %p79, %s80, %s81
      %p85 = pneg %p79
      %p86 = scmp.eq.s32.totalorder %s18, 1
      %p87 = por %p85, %p86
      %p88 = scmp.ne.s32.totalorder %s80, %s83
      %p89 = scmp.eq.s32.totalorder %s18, 0
      %p90 = por %p88, %p89
      %p91 = scmp.ne.s32.totalorder %s80, %s83
      %p92 = scmp.eq.s32.totalorder %s23, 1
      %p93 = por %p91, %p92
      %p94 = scmp.ne.s32.totalorder %s83, %s84
      %p95 = scmp.eq.s32.totalorder %s23, 0
      %p96 = por %p94, %p95
      %p97 = scmp.ne.s32.totalorder %s83, %s84
      %p98 = scmp.eq.s32.totalorder %s24, 1
      %p99 = por %p97, %p98
      %p101 = scmp.ne.s32.totalorder %s84, %s100
      %p102 = scmp.eq.s32.totalorder %s24, 0
      %p103 = por %p101, %p102
      %s104 = ssub.s32 %s18, %s25
      %p105 = scmp.eq.s32.totalorder %s104, 0
      %s107 = sadd.s32 %s106, 1
      %s108 = scalar_select %p105, %s106, %s107
      %p111 = pneg %p105
      %p112 = scmp.eq.s32.totalorder %s18, 1
      %p113 = por %p111, %p112
      %p114 = scmp.ne.s32.totalorder %s106, %s109
      %p115 = scmp.eq.s32.totalorder %s18, 0
      %p116 = por %p114, %p115
      %p117 = scmp.ne.s32.totalorder %s106, %s109
      %p118 = scmp.eq.s32.totalorder %s23, 1
      %p119 = por %p117, %p118
      %p120 = scmp.ne.s32.totalorder %s109, %s110
      %p121 = scmp.eq.s32.totalorder %s23, 0
      %p122 = por %p120, %p121
      %p123 = scmp.ne.s32.totalorder %s109, %s110
      %p124 = scmp.eq.s32.totalorder %s24, 1
      %p125 = por %p123, %p124
      %p127 = scmp.ne.s32.totalorder %s110, %s126
      %p128 = scmp.eq.s32.totalorder %s24, 0
      %p129 = por %p127, %p128
      %p130 = scmp.le.s32.totalorder 1, %s18
      %p131 = scmp.lt.s32.totalorder %s18, 3
      %p132 = pnand %p130, %p131
      %p133 = pneg %p132
      // Predicated region
      $region9: #{tpu_custom_call.1} parent=5 // pred_check
        _
      $region10: #{tpu_custom_call.1} parent=5 // pred_check_branch
        %135 = sbr.rel (%p132) target = $region12
      $region11: #{tpu_custom_call.1} parent=5 // pred_region
        %s136 = ssub.s32 %s18, 1
      $region12: #{tpu_custom_call.1} parent=5 // pred_fallthru
        _
      %p137 = scmp.lt.s32.totalorder %s18, 2
      // Predicated region
      $region13: #{tpu_custom_call.1} parent=5 // pred_check
        %p138 = pneg %p137
      $region14: #{tpu_custom_call.1} parent=5 // pred_check_branch
        %140 = sbr.rel (%p138) target = $region16
      $region15: #{tpu_custom_call.1} parent=5 // pred_region
        // Predicated region
        $region17: #{tpu_custom_call.1} parent=15 // pred_check
          %p141 = pneg %p38
        $region18: #{tpu_custom_call.1} parent=15 // pred_check_branch
          %143 = sbr.rel (%p141) target = $region20
        $region19: #{tpu_custom_call.1} parent=15 // pred_region
          %s144 = sand.u32 %s28, 1
          %s145 = scalar_lea.sflag [#allocation3], %s144
          %s146 = sand.u32 %s28, 1
          %s147 = smul.addr %s146, 160
          %s148 = scalar_lea.vmem [#allocation2], %s147
          %s149 = smul.u32 10, %s18
          %151 = vsyncadd %s145, 0
          %s152 = smul.addr %s149, 2
          %s153 = smul.addr %s152, 8
          %s154 = scalar_lea.hbm %s0, %s153
          %s155 = sshll.u32 %s154, 4
          %s156 = int_to_ptr.hbm [resolvable:$true] %s155
          %s157 = sshll.u32 %s148, 4
          %s158 = int_to_ptr.vmem [resolvable:$true] %s157
          %163 = dma.hbm_to_vmem [thread:$0]  %s156, 2560, %s158, %s145, 256, 256, 16
        $region20: #{tpu_custom_call.1} parent=15 // pred_fallthru
          _
        // Predicated region
        $region21: #{tpu_custom_call.1} parent=15 // pred_check
          %p164 = pneg %p64
        $region22: #{tpu_custom_call.1} parent=15 // pred_check_branch
          %166 = sbr.rel (%p164) target = $region24
        $region23: #{tpu_custom_call.1} parent=15 // pred_region
          %s167 = sand.u32 %s54, 1
          %s168 = scalar_lea.sflag [#allocation6], %s167
          %s169 = sand.u32 %s54, 1
          %s170 = smul.addr %s169, 160
          %s171 = scalar_lea.vmem [#allocation5], %s170
          %s172 = smul.u32 10, %s18
          %174 = vsyncadd %s168, 0
          %s175 = smul.addr %s172, 2
          %s176 = smul.addr %s175, 8
          %s177 = scalar_lea.hbm %s1, %s176
          %s178 = sshll.u32 %s177, 4
          %s179 = int_to_ptr.hbm [resolvable:$true] %s178
          %s180 = sshll.u32 %s171, 4
          %s181 = int_to_ptr.vmem [resolvable:$true] %s180
          %186 = dma.hbm_to_vmem [thread:$0]  %s179, 2560, %s181, %s168, 256, 256, 16
        $region24: #{tpu_custom_call.1} parent=15 // pred_fallthru
          _
        // Predicated region
        $region25: #{tpu_custom_call.1} parent=15 // pred_check
          %p187 = pneg %p90
        $region26: #{tpu_custom_call.1} parent=15 // pred_check_branch
          %189 = sbr.rel (%p187) target = $region28
        $region27: #{tpu_custom_call.1} parent=15 // pred_region
          %s190 = smul.u32 10, %s18
          %p191 = scmp.lt.s32.totalorder %s190, 19
          %s192 = scalar_select %p191, %s190, 19
          %s193 = smul.addr %s192, 8
          %s194 = scalar_lea.vmem %s2, %s193
          %s195 = smul.u32 10, %s18
        $region28: #{tpu_custom_call.1} parent=15 // pred_fallthru
          _
      $region16: #{tpu_custom_call.1} parent=5 // pred_fallthru
        _
      %p196 = scmp.le.s32.totalorder 1, %s18
      %p197 = scmp.lt.s32.totalorder %s18, 3
      %p198 = pnand %p196, %p197
      %p199 = pneg %p198
      // Predicated region
      $region29: #{tpu_custom_call.1} parent=5 // pred_check
        _
      $region30: #{tpu_custom_call.1} parent=5 // pred_check_branch
        %201 = sbr.rel (%p198) target = $region32
      $region31: #{tpu_custom_call.1} parent=5 // pred_region
        %s202 = ssub.s32 %s18, 1
        %s203 = sand.u32 %s31, 1
        %s204 = scalar_lea.sflag [#allocation3], %s203
        %s205 = sand.u32 %s31, 1
        %s206 = smul.addr %s205, 160
        %s207 = scalar_lea.vmem [#allocation2], %s206
        // Predicated region
        $region33: #{tpu_custom_call.1} parent=31 // pred_check
          %p208 = pneg %p44
        $region34: #{tpu_custom_call.1} parent=31 // pred_check_branch
          %210 = sbr.rel (%p208) target = $region36
        $region35: #{tpu_custom_call.1} parent=31 // pred_region
          %212 = dma.done %s204, 2560
        $region36: #{tpu_custom_call.1} parent=31 // pred_fallthru
          _
        %s213 = sand.u32 %s57, 1
        %s214 = scalar_lea.sflag [#allocation6], %s213
        %s215 = sand.u32 %s57, 1
        %s216 = smul.addr %s215, 160
        %s217 = scalar_lea.vmem [#allocation5], %s216
        // Predicated region
        $region37: #{tpu_custom_call.1} parent=31 // pred_check
          %p218 = pneg %p70
        $region38: #{tpu_custom_call.1} parent=31 // pred_check_branch
          %220 = sbr.rel (%p218) target = $region40
        $region39: #{tpu_custom_call.1} parent=31 // pred_region
          %222 = dma.done %s214, 2560
        $region40: #{tpu_custom_call.1} parent=31 // pred_fallthru
          _
        %s223 = sand.u32 %s31, 1
        %s224 = scalar_lea.sflag [#allocation3], %s223
        %s225 = sand.u32 %s31, 1
        %s226 = smul.addr %s225, 160
        %s227 = scalar_lea.vmem [#allocation2], %s226
        %p228 = pneg %p44
        %p229 = pneg %p41
        %s230 = sand.u32 %s57, 1
        %s231 = scalar_lea.sflag [#allocation6], %s230
        %s232 = sand.u32 %s57, 1
        %s233 = smul.addr %s232, 160
        %s234 = scalar_lea.vmem [#allocation5], %s233
        %p235 = pneg %p70
        %p236 = pneg %p67
        %s237 = smul.u32 10, %s23
        %p238 = scmp.lt.s32.totalorder %s237, 19
        %s239 = scalar_select %p238, %s237, 19
        %s240 = smul.addr %s239, 8
        %s241 = scalar_lea.vmem %s2, %s240
        %p242 = pneg %p96
        %p243 = pneg %p93
        %p244 = pneg %p122
        %p245 = pneg %p119
        %s246 = sand.u32 %s109, 1
        %s247 = scalar_lea.sflag [#allocation4], %s246
        %s248 = sand.u32 %s109, 1
        %s249 = smul.addr %s248, 160
        %s250 = scalar_lea.vmem [#allocation7], %s249
        %s251 = smul.u32 10, %s23
        %s252 = smul.u32 10, %s23
        %s253 = smul.u32 10, %s23
        %p254 = scmp.lt.s32.totalorder %s253, 19
        %s255 = scalar_select %p254, %s253, 19
        %s256 = smul.addr %s255, 8
        %s257 = scalar_lea.vmem %s2, %s256
        %s258 = smul.u32 10, %s23
        %s259 = smul.u32 10, %s23
        %v260 = vld [vmem:[%s207] sm:$0xff]
        %v261 = vld [vmem:[%s207 + $0x8] sm:$0xff]
        %v262 = vld [vmem:[%s207 + $0x10] sm:$0xff]
        %v263 = vld [vmem:[%s207 + $0x18] sm:$0xff]
        %v264 = vld [vmem:[%s207 + $0x20] sm:$0xff]
        %v265 = vld [vmem:[%s207 + $0x28] sm:$0xff]
        %v266 = vld [vmem:[%s207 + $0x30] sm:$0xff]
        %v267 = vld [vmem:[%s207 + $0x38] sm:$0xff]
        %v268 = vld [vmem:[%s207 + $0x40] sm:$0xff]
        %v269 = vld [vmem:[%s207 + $0x48] sm:$0xff]
        %v270 = vld [vmem:[%s207 + $0x50] sm:$0xff]
        %v271 = vld [vmem:[%s207 + $0x58] sm:$0xff]
        %v272 = vld [vmem:[%s207 + $0x60] sm:$0xff]
        %v273 = vld [vmem:[%s207 + $0x68] sm:$0xff]
        %v274 = vld [vmem:[%s207 + $0x70] sm:$0xff]
        %v275 = vld [vmem:[%s207 + $0x78] sm:$0xff]
        %v276 = vld [vmem:[%s207 + $0x80] sm:$0xff]
        %v277 = vld [vmem:[%s207 + $0x88] sm:$0xff]
        %v278 = vld [vmem:[%s207 + $0x90] sm:$0xff]
        %v279 = vld [vmem:[%s207 + $0x98] sm:$0xff]
        %vm280 = vcmask 556032
        %v281 = vsel %vm280, %v261, 0.0
        %v282 = vadd.f32 %v260, %v281
        %283 = vadd.xlane.f32.xlu0 %v282
        %v284 = vpop.xlane.xlu0 %283
        %v285 = vsel %vm280, %v263, 0.0
        %v286 = vadd.f32 %v262, %v285
        %287 = vadd.xlane.f32.xlu0 %v286
        %v288 = vpop.xlane.xlu0 %287
        %v289 = vsel %vm280, %v265, 0.0
        %v290 = vadd.f32 %v264, %v289
        %291 = vadd.xlane.f32.xlu0 %v290
        %v292 = vpop.xlane.xlu0 %291
        %v293 = vsel %vm280, %v267, 0.0
        %v294 = vadd.f32 %v266, %v293
        %295 = vadd.xlane.f32.xlu0 %v294
        %v296 = vpop.xlane.xlu0 %295
        %v297 = vsel %vm280, %v269, 0.0
        %v298 = vadd.f32 %v268, %v297
        %299 = vadd.xlane.f32.xlu0 %v298
        %v300 = vpop.xlane.xlu0 %299
        %v301 = vsel %vm280, %v271, 0.0
        %v302 = vadd.f32 %v270, %v301
        %303 = vadd.xlane.f32.xlu0 %v302
        %v304 = vpop.xlane.xlu0 %303
        %v305 = vsel %vm280, %v273, 0.0
        %v306 = vadd.f32 %v272, %v305
        %307 = vadd.xlane.f32.xlu0 %v306
        %v308 = vpop.xlane.xlu0 %307
        %v309 = vsel %vm280, %v275, 0.0
        %v310 = vadd.f32 %v274, %v309
        %311 = vadd.xlane.f32.xlu0 %v310
        %v312 = vpop.xlane.xlu0 %311
        %v313 = vsel %vm280, %v277, 0.0
        %v314 = vadd.f32 %v276, %v313
        %315 = vadd.xlane.f32.xlu0 %v314
        %v316 = vpop.xlane.xlu0 %315
        %v317 = vsel %vm280, %v279, 0.0
        %v318 = vadd.f32 %v278, %v317
        %319 = vadd.xlane.f32.xlu0 %v318
        %v320 = vpop.xlane.xlu0 %319
        %v321 = vmul.f32 %v260, %v260
        %v322 = vmul.f32 %v261, %v261
        %v323 = vmul.f32 %v262, %v262
        %v324 = vmul.f32 %v263, %v263
        %v325 = vmul.f32 %v264, %v264
        %v326 = vmul.f32 %v265, %v265
        %v327 = vmul.f32 %v266, %v266
        %v328 = vmul.f32 %v267, %v267
        %v329 = vmul.f32 %v268, %v268
        %v330 = vmul.f32 %v269, %v269
        %v331 = vmul.f32 %v270, %v270
        %v332 = vmul.f32 %v271, %v271
        %v333 = vmul.f32 %v272, %v272
        %v334 = vmul.f32 %v273, %v273
        %v335 = vmul.f32 %v274, %v274
        %v336 = vmul.f32 %v275, %v275
        %v337 = vmul.f32 %v276, %v276
        %v338 = vmul.f32 %v277, %v277
        %v339 = vmul.f32 %v278, %v278
        %v340 = vmul.f32 %v279, %v279
        %v341 = vsel %vm280, %v322, 0.0
        %v342 = vadd.f32 %v321, %v341
        %343 = vadd.xlane.f32.xlu0 %v342
        %v344 = vpop.xlane.xlu0 %343
        %v345 = vsel %vm280, %v324, 0.0
        %v346 = vadd.f32 %v323, %v345
        %347 = vadd.xlane.f32.xlu0 %v346
        %v348 = vpop.xlane.xlu0 %347
        %v349 = vsel %vm280, %v326, 0.0
        %v350 = vadd.f32 %v325, %v349
        %351 = vadd.xlane.f32.xlu0 %v350
        %v352 = vpop.xlane.xlu0 %351
        %v353 = vsel %vm280, %v328, 0.0
        %v354 = vadd.f32 %v327, %v353
        %355 = vadd.xlane.f32.xlu0 %v354
        %v356 = vpop.xlane.xlu0 %355
        %v357 = vsel %vm280, %v330, 0.0
        %v358 = vadd.f32 %v329, %v357
        %359 = vadd.xlane.f32.xlu0 %v358
        %v360 = vpop.xlane.xlu0 %359
        %v361 = vsel %vm280, %v332, 0.0
        %v362 = vadd.f32 %v331, %v361
        %363 = vadd.xlane.f32.xlu0 %v362
        %v364 = vpop.xlane.xlu0 %363
        %v365 = vsel %vm280, %v334, 0.0
        %v366 = vadd.f32 %v333, %v365
        %367 = vadd.xlane.f32.xlu0 %v366
        %v368 = vpop.xlane.xlu0 %367
        %v369 = vsel %vm280, %v336, 0.0
        %v370 = vadd.f32 %v335, %v369
        %371 = vadd.xlane.f32.xlu0 %v370
        %v372 = vpop.xlane.xlu0 %371
        %v373 = vsel %vm280, %v338, 0.0
        %v374 = vadd.f32 %v337, %v373
        %375 = vadd.xlane.f32.xlu0 %v374
        %v376 = vpop.xlane.xlu0 %375
        %v377 = vsel %vm280, %v340, 0.0
        %v378 = vadd.f32 %v339, %v377
        %379 = vadd.xlane.f32.xlu0 %v378
        %v380 = vpop.xlane.xlu0 %379
        %v381 = vmul.f32 %v284, 0.0051020407
        %v382 = vmul.f32 %v288, 0.0051020407
        %v383 = vmul.f32 %v292, 0.0051020407
        %v384 = vmul.f32 %v296, 0.0051020407
        %v385 = vmul.f32 %v300, 0.0051020407
        %v386 = vmul.f32 %v304, 0.0051020407
        %v387 = vmul.f32 %v308, 0.0051020407
        %v388 = vmul.f32 %v312, 0.0051020407
        %v389 = vmul.f32 %v316, 0.0051020407
        %v390 = vmul.f32 %v320, 0.0051020407
        %v391 = vmul.f32 %v344, 0.0051020407
        %v392 = vmul.f32 %v348, 0.0051020407
        %v393 = vmul.f32 %v352, 0.0051020407
        %v394 = vmul.f32 %v356, 0.0051020407
        %v395 = vmul.f32 %v360, 0.0051020407
        %v396 = vmul.f32 %v364, 0.0051020407
        %v397 = vmul.f32 %v368, 0.0051020407
        %v398 = vmul.f32 %v372, 0.0051020407
        %v399 = vmul.f32 %v376, 0.0051020407
        %v400 = vmul.f32 %v380, 0.0051020407
        %v401 = vmul.f32 %v381, %v381
        %v402 = vmul.f32 %v382, %v382
        %v403 = vmul.f32 %v383, %v383
        %v404 = vmul.f32 %v384, %v384
        %v405 = vmul.f32 %v385, %v385
        %v406 = vmul.f32 %v386, %v386
        %v407 = vmul.f32 %v387, %v387
        %v408 = vmul.f32 %v388, %v388
        %v409 = vmul.f32 %v389, %v389
        %v410 = vmul.f32 %v390, %v390
        %v411 = vsub.f32 %v391, %v401
        %v412 = vsub.f32 %v392, %v402
        %v413 = vsub.f32 %v393, %v403
        %v414 = vsub.f32 %v394, %v404
        %v415 = vsub.f32 %v395, %v405
        %v416 = vsub.f32 %v396, %v406
        %v417 = vsub.f32 %v397, %v407
        %v418 = vsub.f32 %v398, %v408
        %v419 = vsub.f32 %v399, %v409
        %v420 = vsub.f32 %v400, %v410
        %v421 = vmax.f32 %v411, 0.0
        %v422 = vmax.f32 %v412, 0.0
        %v423 = vmax.f32 %v413, 0.0
        %v424 = vmax.f32 %v414, 0.0
        %v425 = vmax.f32 %v415, 0.0
        %v426 = vmax.f32 %v416, 0.0
        %v427 = vmax.f32 %v417, 0.0
        %v428 = vmax.f32 %v418, 0.0
        %v429 = vmax.f32 %v419, 0.0
        %v430 = vmax.f32 %v420, 0.0
        %v431 = vadd.f32 %v421, 1e-05
        %v432 = vadd.f32 %v422, 1e-05
        %v433 = vadd.f32 %v423, 1e-05
        %v434 = vadd.f32 %v424, 1e-05
        %v435 = vadd.f32 %v425, 1e-05
        %v436 = vadd.f32 %v426, 1e-05
        %v437 = vadd.f32 %v427, 1e-05
        %v438 = vadd.f32 %v428, 1e-05
        %v439 = vadd.f32 %v429, 1e-05
        %v440 = vadd.f32 %v430, 1e-05
        %v441 = vrsqrt.pop %v431
        %v442 = vmul.f32 %v441, %v431
        %v443 = vmul.f32 %v442, %v441
        %v444 = vmul.f32 0.5, %v443
        %v445 = vsub.f32 1.5, %v444
        %v446 = vmul.f32 %v441, %v445
        %vm447 = vweird.f32 %v431
        %vm448 = vweird.f32 %v441
        %vm449 = vmor %vm447, %vm448
        %v450 = vsel %vm449, %v441, %v446
        %v451 = vrsqrt.pop %v432
        %v452 = vmul.f32 %v451, %v432
        %v453 = vmul.f32 %v452, %v451
        %v454 = vmul.f32 0.5, %v453
        %v455 = vsub.f32 1.5, %v454
        %v456 = vmul.f32 %v451, %v455
        %vm457 = vweird.f32 %v432
        %vm458 = vweird.f32 %v451
        %vm459 = vmor %vm457, %vm458
        %v460 = vsel %vm459, %v451, %v456
        %v461 = vrsqrt.pop %v433
        %v462 = vmul.f32 %v461, %v433
        %v463 = vmul.f32 %v462, %v461
        %v464 = vmul.f32 0.5, %v463
        %v465 = vsub.f32 1.5, %v464
        %v466 = vmul.f32 %v461, %v465
        %vm467 = vweird.f32 %v433
        %vm468 = vweird.f32 %v461
        %vm469 = vmor %vm467, %vm468
        %v470 = vsel %vm469, %v461, %v466
        %v471 = vrsqrt.pop %v434
        %v472 = vmul.f32 %v471, %v434
        %v473 = vmul.f32 %v472, %v471
        %v474 = vmul.f32 0.5, %v473
        %v475 = vsub.f32 1.5, %v474
        %v476 = vmul.f32 %v471, %v475
        %vm477 = vweird.f32 %v434
        %vm478 = vweird.f32 %v471
        %vm479 = vmor %vm477, %vm478
        %v480 = vsel %vm479, %v471, %v476
        %v481 = vrsqrt.pop %v435
        %v482 = vmul.f32 %v481, %v435
        %v483 = vmul.f32 %v482, %v481
        %v484 = vmul.f32 0.5, %v483
        %v485 = vsub.f32 1.5, %v484
        %v486 = vmul.f32 %v481, %v485
        %vm487 = vweird.f32 %v435
        %vm488 = vweird.f32 %v481
        %vm489 = vmor %vm487, %vm488
        %v490 = vsel %vm489, %v481, %v486
        %v491 = vrsqrt.pop %v436
        %v492 = vmul.f32 %v491, %v436
        %v493 = vmul.f32 %v492, %v491
        %v494 = vmul.f32 0.5, %v493
        %v495 = vsub.f32 1.5, %v494
        %v496 = vmul.f32 %v491, %v495
        %vm497 = vweird.f32 %v436
        %vm498 = vweird.f32 %v491
        %vm499 = vmor %vm497, %vm498
        %v500 = vsel %vm499, %v491, %v496
        %v501 = vrsqrt.pop %v437
        %v502 = vmul.f32 %v501, %v437
        %v503 = vmul.f32 %v502, %v501
        %v504 = vmul.f32 0.5, %v503
        %v505 = vsub.f32 1.5, %v504
        %v506 = vmul.f32 %v501, %v505
        %vm507 = vweird.f32 %v437
        %vm508 = vweird.f32 %v501
        %vm509 = vmor %vm507, %vm508
        %v510 = vsel %vm509, %v501, %v506
        %v511 = vrsqrt.pop %v438
        %v512 = vmul.f32 %v511, %v438
        %v513 = vmul.f32 %v512, %v511
        %v514 = vmul.f32 0.5, %v513
        %v515 = vsub.f32 1.5, %v514
        %v516 = vmul.f32 %v511, %v515
        %vm517 = vweird.f32 %v438
        %vm518 = vweird.f32 %v511
        %vm519 = vmor %vm517, %vm518
        %v520 = vsel %vm519, %v511, %v516
        %v521 = vrsqrt.pop %v439
        %v522 = vmul.f32 %v521, %v439
        %v523 = vmul.f32 %v522, %v521
        %v524 = vmul.f32 0.5, %v523
        %v525 = vsub.f32 1.5, %v524
        %v526 = vmul.f32 %v521, %v525
        %vm527 = vweird.f32 %v439
        %vm528 = vweird.f32 %v521
        %vm529 = vmor %vm527, %vm528
        %v530 = vsel %vm529, %v521, %v526
        %v531 = vrsqrt.pop %v440
        %v532 = vmul.f32 %v531, %v440
        %v533 = vmul.f32 %v532, %v531
        %v534 = vmul.f32 0.5, %v533
        %v535 = vsub.f32 1.5, %v534
        %v536 = vmul.f32 %v531, %v535
        %vm537 = vweird.f32 %v440
        %vm538 = vweird.f32 %v531
        %vm539 = vmor %vm537, %vm538
        %v540 = vsel %vm539, %v531, %v536
        %v541 = vld [vmem:[%s257] sm:$0xff]
        %v542 = vld [vmem:[%s257 + $0x8] sm:$0xff]
        %v543 = vld [vmem:[%s257 + $0x10] sm:$0xff]
        %v544 = vld [vmem:[%s257 + $0x18] sm:$0xff]
        %v545 = vld [vmem:[%s257 + $0x20] sm:$0xff]
        %v546 = vld [vmem:[%s257 + $0x28] sm:$0xff]
        %v547 = vld [vmem:[%s257 + $0x30] sm:$0xff]
        %v548 = vld [vmem:[%s257 + $0x38] sm:$0xff]
        %v549 = vld [vmem:[%s257 + $0x40] sm:$0xff]
        %v550 = vld [vmem:[%s257 + $0x48] sm:$0xff]
        %v551 = vmul.f32 %v541, %v450
        %v552 = vmul.f32 %v542, %v460
        %v553 = vmul.f32 %v543, %v470
        %v554 = vmul.f32 %v544, %v480
        %v555 = vmul.f32 %v545, %v490
        %v556 = vmul.f32 %v546, %v500
        %v557 = vmul.f32 %v547, %v510
        %v558 = vmul.f32 %v548, %v520
        %v559 = vmul.f32 %v549, %v530
        %v560 = vmul.f32 %v550, %v540
        %v561 = vmul.f32 %v381, %v551
        %v562 = vmul.f32 %v382, %v552
        %v563 = vmul.f32 %v383, %v553
        %v564 = vmul.f32 %v384, %v554
        %v565 = vmul.f32 %v385, %v555
        %v566 = vmul.f32 %v386, %v556
        %v567 = vmul.f32 %v387, %v557
        %v568 = vmul.f32 %v388, %v558
        %v569 = vmul.f32 %v389, %v559
        %v570 = vmul.f32 %v390, %v560
        %581 = vrot.lane.b32.xlu0 %v561, 1
        %v582 = vpop.permute.xlu0 %581
        %583 = vrot.lane.b32.xlu0 %v562, 1
        %v584 = vpop.permute.xlu0 %583
        %585 = vrot.lane.b32.xlu0 %v563, 1
        %v586 = vpop.permute.xlu0 %585
        %587 = vrot.lane.b32.xlu0 %v564, 1
        %v588 = vpop.permute.xlu0 %587
        %589 = vrot.lane.b32.xlu0 %v565, 1
        %v590 = vpop.permute.xlu0 %589
        %591 = vrot.lane.b32.xlu0 %v566, 1
        %v592 = vpop.permute.xlu0 %591
        %593 = vrot.lane.b32.xlu0 %v567, 1
        %v594 = vpop.permute.xlu0 %593
        %595 = vrot.lane.b32.xlu0 %v568, 1
        %v596 = vpop.permute.xlu0 %595
        %597 = vrot.lane.b32.xlu0 %v569, 1
        %v598 = vpop.permute.xlu0 %597
        %599 = vrot.lane.b32.xlu0 %v570, 1
        %v600 = vpop.permute.xlu0 %599
        %v611 = vsub.f32 %v541, %v582
        %v612 = vsub.f32 %v542, %v584
        %v613 = vsub.f32 %v543, %v586
        %v614 = vsub.f32 %v544, %v588
        %v615 = vsub.f32 %v545, %v590
        %v616 = vsub.f32 %v546, %v592
        %v617 = vsub.f32 %v547, %v594
        %v618 = vsub.f32 %v548, %v596
        %v619 = vsub.f32 %v549, %v598
        %v620 = vsub.f32 %v550, %v600
        %622 = vset.pattern.permute.xlu0 0
        %623 = vperm.xlu0 %622, %v551
        %v624 = vpop.permute.xlu0 %623
        %627 = vset.pattern.permute.xlu0 0
        %628 = vperm.xlu0 %627, %v552
        %v629 = vpop.permute.xlu0 %628
        %632 = vset.pattern.permute.xlu0 0
        %633 = vperm.xlu0 %632, %v553
        %v634 = vpop.permute.xlu0 %633
        %637 = vset.pattern.permute.xlu0 0
        %638 = vperm.xlu0 %637, %v554
        %v639 = vpop.permute.xlu0 %638
        %642 = vset.pattern.permute.xlu0 0
        %643 = vperm.xlu0 %642, %v555
        %v644 = vpop.permute.xlu0 %643
        %647 = vset.pattern.permute.xlu0 0
        %648 = vperm.xlu0 %647, %v556
        %v649 = vpop.permute.xlu0 %648
        %652 = vset.pattern.permute.xlu0 0
        %653 = vperm.xlu0 %652, %v557
        %v654 = vpop.permute.xlu0 %653
        %657 = vset.pattern.permute.xlu0 0
        %658 = vperm.xlu0 %657, %v558
        %v659 = vpop.permute.xlu0 %658
        %662 = vset.pattern.permute.xlu0 0
        %663 = vperm.xlu0 %662, %v559
        %v664 = vpop.permute.xlu0 %663
        %667 = vset.pattern.permute.xlu0 0
        %668 = vperm.xlu0 %667, %v560
        %v669 = vpop.permute.xlu0 %668
        %v671 = vmul.f32 %v260, %v624
        %v672 = vmul.f32 %v261, %v624
        %v673 = vmul.f32 %v262, %v629
        %v674 = vmul.f32 %v263, %v629
        %v675 = vmul.f32 %v264, %v634
        %v676 = vmul.f32 %v265, %v634
        %v677 = vmul.f32 %v266, %v639
        %v678 = vmul.f32 %v267, %v639
        %v679 = vmul.f32 %v268, %v644
        %v680 = vmul.f32 %v269, %v644
        %v681 = vmul.f32 %v270, %v649
        %v682 = vmul.f32 %v271, %v649
        %v683 = vmul.f32 %v272, %v654
        %v684 = vmul.f32 %v273, %v654
        %v685 = vmul.f32 %v274, %v659
        %v686 = vmul.f32 %v275, %v659
        %v687 = vmul.f32 %v276, %v664
        %v688 = vmul.f32 %v277, %v664
        %v689 = vmul.f32 %v278, %v669
        %v690 = vmul.f32 %v279, %v669
        %692 = vset.pattern.permute.xlu0 1
        %693 = vperm.xlu0 %692, %v611
        %v694 = vpop.permute.xlu0 %693
        %697 = vset.pattern.permute.xlu0 1
        %698 = vperm.xlu0 %697, %v612
        %v699 = vpop.permute.xlu0 %698
        %702 = vset.pattern.permute.xlu0 1
        %703 = vperm.xlu0 %702, %v613
        %v704 = vpop.permute.xlu0 %703
        %707 = vset.pattern.permute.xlu0 1
        %708 = vperm.xlu0 %707, %v614
        %v709 = vpop.permute.xlu0 %708
        %712 = vset.pattern.permute.xlu0 1
        %713 = vperm.xlu0 %712, %v615
        %v714 = vpop.permute.xlu0 %713
        %717 = vset.pattern.permute.xlu0 1
        %718 = vperm.xlu0 %717, %v616
        %v719 = vpop.permute.xlu0 %718
        %722 = vset.pattern.permute.xlu0 1
        %723 = vperm.xlu0 %722, %v617
        %v724 = vpop.permute.xlu0 %723
        %727 = vset.pattern.permute.xlu0 1
        %728 = vperm.xlu0 %727, %v618
        %v729 = vpop.permute.xlu0 %728
        %732 = vset.pattern.permute.xlu0 1
        %733 = vperm.xlu0 %732, %v619
        %v734 = vpop.permute.xlu0 %733
        %737 = vset.pattern.permute.xlu0 1
        %738 = vperm.xlu0 %737, %v620
        %v739 = vpop.permute.xlu0 %738
        %v741 = vadd.f32 %v671, %v694
        %v742 = vadd.f32 %v672, %v694
        %v743 = vadd.f32 %v673, %v699
        %v744 = vadd.f32 %v674, %v699
        %v745 = vadd.f32 %v675, %v704
        %v746 = vadd.f32 %v676, %v704
        %v747 = vadd.f32 %v677, %v709
        %v748 = vadd.f32 %v678, %v709
        %v749 = vadd.f32 %v679, %v714
        %v750 = vadd.f32 %v680, %v714
        %v751 = vadd.f32 %v681, %v719
        %v752 = vadd.f32 %v682, %v719
        %v753 = vadd.f32 %v683, %v724
        %v754 = vadd.f32 %v684, %v724
        %v755 = vadd.f32 %v685, %v729
        %v756 = vadd.f32 %v686, %v729
        %v757 = vadd.f32 %v687, %v734
        %v758 = vadd.f32 %v688, %v734
        %v759 = vadd.f32 %v689, %v739
        %v760 = vadd.f32 %v690, %v739
        %v761 = vld [vmem:[%s217] sm:$0xff]
        %v762 = vld [vmem:[%s217 + $0x8] sm:$0xff]
        %v763 = vld [vmem:[%s217 + $0x10] sm:$0xff]
        %v764 = vld [vmem:[%s217 + $0x18] sm:$0xff]
        %v765 = vld [vmem:[%s217 + $0x20] sm:$0xff]
        %v766 = vld [vmem:[%s217 + $0x28] sm:$0xff]
        %v767 = vld [vmem:[%s217 + $0x30] sm:$0xff]
        %v768 = vld [vmem:[%s217 + $0x38] sm:$0xff]
        %v769 = vld [vmem:[%s217 + $0x40] sm:$0xff]
        %v770 = vld [vmem:[%s217 + $0x48] sm:$0xff]
        %v771 = vld [vmem:[%s217 + $0x50] sm:$0xff]
        %v772 = vld [vmem:[%s217 + $0x58] sm:$0xff]
        %v773 = vld [vmem:[%s217 + $0x60] sm:$0xff]
        %v774 = vld [vmem:[%s217 + $0x68] sm:$0xff]
        %v775 = vld [vmem:[%s217 + $0x70] sm:$0xff]
        %v776 = vld [vmem:[%s217 + $0x78] sm:$0xff]
        %v777 = vld [vmem:[%s217 + $0x80] sm:$0xff]
        %v778 = vld [vmem:[%s217 + $0x88] sm:$0xff]
        %v779 = vld [vmem:[%s217 + $0x90] sm:$0xff]
        %v780 = vld [vmem:[%s217 + $0x98] sm:$0xff]
        %v781 = vadd.f32 %v741, %v761
        %v782 = vadd.f32 %v742, %v762
        %v783 = vadd.f32 %v743, %v763
        %v784 = vadd.f32 %v744, %v764
        %v785 = vadd.f32 %v745, %v765
        %v786 = vadd.f32 %v746, %v766
        %v787 = vadd.f32 %v747, %v767
        %v788 = vadd.f32 %v748, %v768
        %v789 = vadd.f32 %v749, %v769
        %v790 = vadd.f32 %v750, %v770
        %v791 = vadd.f32 %v751, %v771
        %v792 = vadd.f32 %v752, %v772
        %v793 = vadd.f32 %v753, %v773
        %v794 = vadd.f32 %v754, %v774
        %v795 = vadd.f32 %v755, %v775
        %v796 = vadd.f32 %v756, %v776
        %v797 = vadd.f32 %v757, %v777
        %v798 = vadd.f32 %v758, %v778
        %v799 = vadd.f32 %v759, %v779
        %v800 = vadd.f32 %v760, %v780
        %v801 = vmax.f32 %v781, 0.0
        %v802 = vmax.f32 %v782, 0.0
        %v803 = vmax.f32 %v783, 0.0
        %v804 = vmax.f32 %v784, 0.0
        %v805 = vmax.f32 %v785, 0.0
        %v806 = vmax.f32 %v786, 0.0
        %v807 = vmax.f32 %v787, 0.0
        %v808 = vmax.f32 %v788, 0.0
        %v809 = vmax.f32 %v789, 0.0
        %v810 = vmax.f32 %v790, 0.0
        %v811 = vmax.f32 %v791, 0.0
        %v812 = vmax.f32 %v792, 0.0
        %v813 = vmax.f32 %v793, 0.0
        %v814 = vmax.f32 %v794, 0.0
        %v815 = vmax.f32 %v795, 0.0
        %v816 = vmax.f32 %v796, 0.0
        %v817 = vmax.f32 %v797, 0.0
        %v818 = vmax.f32 %v798, 0.0
        %v819 = vmax.f32 %v799, 0.0
        %v820 = vmax.f32 %v800, 0.0
        %821 = vst [vmem:[%s250] sm:$0xff] %v801
        %822 = vst.msk [vmem:[%s250 + $0x8] sm:$0xff] %vm280, %v802
        %823 = vst [vmem:[%s250 + $0x10] sm:$0xff] %v803
        %824 = vst.msk [vmem:[%s250 + $0x18] sm:$0xff] %vm280, %v804
        %825 = vst [vmem:[%s250 + $0x20] sm:$0xff] %v805
        %826 = vst.msk [vmem:[%s250 + $0x28] sm:$0xff] %vm280, %v806
        %827 = vst [vmem:[%s250 + $0x30] sm:$0xff] %v807
        %828 = vst.msk [vmem:[%s250 + $0x38] sm:$0xff] %vm280, %v808
        %829 = vst [vmem:[%s250 + $0x40] sm:$0xff] %v809
        %830 = vst.msk [vmem:[%s250 + $0x48] sm:$0xff] %vm280, %v810
        %831 = vst [vmem:[%s250 + $0x50] sm:$0xff] %v811
        %832 = vst.msk [vmem:[%s250 + $0x58] sm:$0xff] %vm280, %v812
        %833 = vst [vmem:[%s250 + $0x60] sm:$0xff] %v813
        %834 = vst.msk [vmem:[%s250 + $0x68] sm:$0xff] %vm280, %v814
        %835 = vst [vmem:[%s250 + $0x70] sm:$0xff] %v815
        %836 = vst.msk [vmem:[%s250 + $0x78] sm:$0xff] %vm280, %v816
        %837 = vst [vmem:[%s250 + $0x80] sm:$0xff] %v817
        %838 = vst.msk [vmem:[%s250 + $0x88] sm:$0xff] %vm280, %v818
        %839 = vst [vmem:[%s250 + $0x90] sm:$0xff] %v819
        %840 = vst.msk [vmem:[%s250 + $0x98] sm:$0xff] %vm280, %v820
        %s841 = sand.u32 %s109, 1
        %s842 = scalar_lea.sflag [#allocation4], %s841
        %s843 = sand.u32 %s109, 1
        %s844 = smul.addr %s843, 160
        %s845 = scalar_lea.vmem [#allocation7], %s844
        // Predicated region
        $region41: #{tpu_custom_call.1} parent=31 // pred_check
          %p846 = pneg %p119
        $region42: #{tpu_custom_call.1} parent=31 // pred_check_branch
          %848 = sbr.rel (%p846) target = $region44
        $region43: #{tpu_custom_call.1} parent=31 // pred_region
          %s849 = smul.u32 10, %s23
          %851 = vsyncadd %s842, 0
          %s852 = smul.addr %s849, 2
          %s853 = smul.addr %s852, 8
          %s854 = scalar_lea.hbm %s3, %s853
          %s855 = sshll.u32 %s845, 4
          %s856 = int_to_ptr.vmem [resolvable:$true] %s855
          %s857 = sshll.u32 %s854, 4
          %s858 = int_to_ptr.hbm [resolvable:$true] %s857
          %863 = dma.vmem_to_hbm [thread:$0]  %s856, 2560, %s858, %s842, 256, 256, 16
        $region44: #{tpu_custom_call.1} parent=31 // pred_fallthru
          _
      $region32: #{tpu_custom_call.1} parent=5 // pred_fallthru
        _
      %p864 = scmp.le.s32.totalorder 2, %s18
      // Predicated region
      $region45: #{tpu_custom_call.1} parent=5 // pred_check
        %p865 = pneg %p864
      $region46: #{tpu_custom_call.1} parent=5 // pred_check_branch
        %867 = sbr.rel (%p865) target = $region48
      $region47: #{tpu_custom_call.1} parent=5 // pred_region
        %s868 = ssub.s32 %s18, 2
        // Predicated region
        $region49: #{tpu_custom_call.1} parent=47 // pred_check
          %p869 = pneg %p125
        $region50: #{tpu_custom_call.1} parent=47 // pred_check_branch
          %871 = sbr.rel (%p869) target = $region52
        $region51: #{tpu_custom_call.1} parent=47 // pred_region
          %s872 = sand.u32 %s110, 1
          %s873 = scalar_lea.sflag [#allocation4], %s872
          %s874 = sand.u32 %s110, 1
          %s875 = smul.addr %s874, 160
          %s876 = scalar_lea.vmem [#allocation7], %s875
          %878 = dma.done %s873, 2560
        $region52: #{tpu_custom_call.1} parent=47 // pred_fallthru
          _
      $region48: #{tpu_custom_call.1} parent=5 // pred_fallthru
        _
    $region6: #{tpu_custom_call.1} parent=1 // loop_footer
      %s22 = sadd.s32 1, %s18
    $region7: #{tpu_custom_call.1} parent=1 // loop_footer_branch
      %17 = sbr.rel target = $region3
    $region8: #{tpu_custom_call.1} parent=1 // loop_exit
      _
    %879 = vsyncpa [#allocation3], 1
    %s880 = scalar_lea.sflag [#allocation3], 1
    %881 = vsyncpa %s880, 1
    %882 = vsyncpa [#allocation6], 1
    %s883 = scalar_lea.sflag [#allocation6], 1
    %884 = vsyncpa %s883, 1
    %885 = vsyncpa [#allocation4], 1
    %s886 = scalar_lea.sflag [#allocation4], 1
    %887 = vsyncpa %s886, 1

</llo_original>
